<compile_context>
chip_gen: v6e
topology: v6e:2x2x1
jax: 0.10.0
libtpu: 0.0.40
codegen_flags: <defaults>
</compile_context>

<pallas_src>
import functools
import math

import jax
import jax.numpy as jnp
from jax import lax
from jax.experimental import pallas as pl
from jax.experimental.pallas import tpu as pltpu

NEG_SLOPE = 0.01  # F.leaky_relu default


def _default_epilogue_dtype():
    """bf16 epilogue on chips with a bf16 VALU (v6e/v7x); f32 elsewhere (v5e)."""
    try:
        kind = jax.devices()[0].device_kind.lower()
    except Exception:
        return jnp.float32
    if any(tag in kind for tag in ("v6", "v7", "7x")):
        return jnp.bfloat16
    return jnp.float32


# ---------------------------------------------------------------------------
# Kernel
# ---------------------------------------------------------------------------
def critic_kernel(state_ref, action_ref,
                  w1_ref, w2s_ref, w2a_ref, w3_ref, w4t_ref,
                  bias_ref,
                  out_ref, *, epilogue_dtype):
    f32 = jnp.float32
    H1 = w1_ref.shape[1]
    H2 = w2s_ref.shape[1]
    H3 = w3_ref.shape[1]

    # Bias slab rows (f32, lane-padded): [b1 | b2 | b3 | b4-scalar].
    b1 = bias_ref[0:1, 0:H1]
    b2 = bias_ref[1:2, 0:H2]
    b3 = bias_ref[2:3, 0:H3]
    b4 = bias_ref[3:4, 0:1]

    def act(z):  # leaky_relu = max(z, slope*z); runs in chip-appropriate dtype
        zc = z.astype(epilogue_dtype)
        return jnp.maximum(zc, NEG_SLOPE * zc)

    # layer 1: t = leaky_relu(state @ W1 + b1)             (bf16 MXU, f32 acc)
    t = act(jnp.dot(state_ref[...], w1_ref[...], preferred_element_type=f32)
            + b1)

    # layer 2: cat(t, action) @ W2 realised as two MXU dots (split weight):
    #   cat(t, a) @ W2 == t @ W2[:H1] + a @ W2[H1:]
    z2 = (jnp.dot(t.astype(w2s_ref.dtype), w2s_ref[...],
                  preferred_element_type=f32)
          + jnp.dot(action_ref[...], w2a_ref[...], preferred_element_type=f32)
          + b2)
    x = act(z2)

    # layer 3: x = leaky_relu(x @ W3 + b3)
    x = act(jnp.dot(x.astype(w3_ref.dtype), w3_ref[...],
                    preferred_element_type=f32)
            + b3)

    # layer 4 (lane-dense): q[0, b] = sum_h w4t[0, h] * x[b, h]   (NT matmul)
    q_row = lax.dot_general(
        w4t_ref[...], x.astype(w4t_ref.dtype),
        dimension_numbers=(((1,), (1,)), ((), ())),
        preferred_element_type=f32)
    out_ref[...] = q_row + b4


# ---------------------------------------------------------------------------
# Wrapper
# ---------------------------------------------------------------------------
def critic_forward(state, action, params, *, block_b=None, epilogue_dtype=None):
    B, S = state.shape
    A = action.shape[1]
    H1 = params["w1"].shape[1]
    H2 = params["w2s"].shape[1]
    H3 = params["w3"].shape[1]

    if epilogue_dtype is None:
        epilogue_dtype = _default_epilogue_dtype()

    # Single grid step for small/medium batches (single-TC chips pay per-step
    # overhead); 128-row parallel tiles only for large batches (megacore).
    if block_b is None:
        tb = B if B <= 512 else 128
    else:
        tb = min(block_b, B)
    num_tiles = pl.cdiv(B, tb)
    padded_b = num_tiles * tb

    bf = jnp.bfloat16
    f32 = jnp.float32

    # Pack biases into a single (4, W) f32 slab -> fewer DMA descriptors.
    width = max(H1, H2, H3, 128)

    def pad_row(b):
        b = jnp.asarray(b, f32).reshape(1, -1)
        return jnp.pad(b, ((0, 0), (0, width - b.shape[1])))

    bias_slab = jnp.concatenate(
        [pad_row(params["b1"]), pad_row(params["b2"]),
         pad_row(params["b3"]), pad_row(params["b4"])], axis=0)   # (4, width)

    args = (
        state.astype(bf),                          # MXU operand
        action.astype(bf),                         # MXU operand (K=A dot)
        params["w1"].astype(bf),
        params["w2s"].astype(bf),
        params["w2a"].astype(bf),
        params["w3"].astype(bf),
        params["w4"].reshape(1, H3).astype(bf),    # pre-transposed (1, H3)
        bias_slab,                                 # f32
    )

    def fixed(shape):
        n = len(shape)
        return pl.BlockSpec(shape, lambda i, _n=n: (0,) * _n)

    in_specs = [
        pl.BlockSpec((tb, S), lambda i: (i, 0)),   # state   (batch-tiled)
        pl.BlockSpec((tb, A), lambda i: (i, 0)),   # action  (batch-tiled)
        fixed(args[2].shape), fixed(args[3].shape), fixed(args[4].shape),
        fixed(args[5].shape), fixed(args[6].shape), fixed(args[7].shape),
    ]
    # Lane-dense output row per batch tile -> unmasked stores.
    out_specs = pl.BlockSpec((1, tb), lambda i: (0, i))

    flops = 2 * B * (S * H1 + H1 * H2 + A * H2 + H2 * H3 + H3)
    bytes_accessed = int(sum(a.size * a.dtype.itemsize for a in args)
                         + padded_b * 4)
    cost = pl.CostEstimate(flops=flops, transcendentals=0,
                           bytes_accessed=bytes_accessed)

    q_row = pl.pallas_call(
        functools.partial(critic_kernel, epilogue_dtype=epilogue_dtype),
        out_shape=jax.ShapeDtypeStruct((1, padded_b), jnp.float32),
        grid=(num_tiles,),
        in_specs=in_specs,
        out_specs=out_specs,
        compiler_params=pltpu.CompilerParams(
            dimension_semantics=("parallel",)),    # megacore over batch tiles
        cost_estimate=cost,
    )(*args)

    return q_row[0, :B].reshape(B, 1)


# ---------------------------------------------------------------------------
# Params / references
# ---------------------------------------------------------------------------
def init_params(key, state_size, action_size, h1=256, h2=256, h3=128):
    """Deterministic synthetic init mirroring Critic.params_reset()."""
    ks = jax.random.split(key, 9)

    def u(k, shape, lim):
        return jax.random.uniform(k, shape, jnp.float32, minval=-lim, maxval=lim)

    # torch `limits()` uses weight.size()[0] == out_features (as written).
    lim1 = 1.0 / math.sqrt(h1)
    lim2 = 1.0 / math.sqrt(h2)
    lim3 = 1.0 / math.sqrt(h3)
    return {
        "w1":  u(ks[0], (state_size, h1), lim1),
        "b1":  u(ks[1], (1, h1), 1.0 / math.sqrt(state_size)),
        # fc2 weight split: rows [:h1] act on `t`, rows [h1:] act on `action`
        "w2s": u(ks[2], (h1, h2), lim2),
        "w2a": u(ks[3], (action_size, h2), lim2),
        "b2":  u(ks[4], (1, h2), 1.0 / math.sqrt(h1 + action_size)),
        "w3":  u(ks[5], (h2, h3), lim3),
        "b3":  u(ks[6], (1, h3), 1.0 / math.sqrt(h2)),
        "w4":  u(ks[7], (h3, 1), 0.003),
        "b4":  u(ks[8], (1, 1), 1.0 / math.sqrt(h3)),
    }


def _leaky_relu_f32(x):
    return jnp.maximum(x, NEG_SLOPE * x)


def critic_reference_f32(state, action, p):
    t = _leaky_relu_f32(state @ p["w1"] + p["b1"])
    x = _leaky_relu_f32(t @ p["w2s"] + action @ p["w2a"] + p["b2"])
    x = _leaky_relu_f32(x @ p["w3"] + p["b3"])
    return x @ p["w4"] + p["b4"]


def critic_reference_matched(state, action, p, epilogue_dtype):
    """Mirrors the kernel compute path (bf16 MXU operands, f32 accumulation,
    chosen epilogue dtype) for a tight numerical check."""
    bf, f32 = jnp.bfloat16, jnp.float32

    def mm(a, b):
        return jnp.dot(a.astype(bf), b.astype(bf), preferred_element_type=f32)

    def act(z):
        zc = z.astype(epilogue_dtype)
        return jnp.maximum(zc, NEG_SLOPE * zc)

    t = act(mm(state, p["w1"]) + p["b1"])
    x = act(mm(t, p["w2s"]) + mm(action, p["w2a"]) + p["b2"])
    x = act(mm(x, p["w3"]) + p["b3"])
    return mm(x, p["w4"]) + p["b4"]


# ---------------------------------------------------------------------------
if __name__ == "__main__":
    # Walker Critic shapes: state=24, action=4, hidden=256/256/128.
    B, S, A = 64, 24, 4
    key = jax.random.PRNGKey(0)
    k_s, k_a, k_p = jax.random.split(key, 3)

    state = jax.random.normal(k_s, (B, S), jnp.float32)
    action = jax.random.uniform(k_a, (B, A), jnp.float32, minval=-1.0, maxval=1.0)
    params = init_params(k_p, S, A)

    ep_dtype = _default_epilogue_dtype()
    q = critic_forward(state, action, params, epilogue_dtype=ep_dtype)
    q = jax.block_until_ready(q)
    assert q.shape == (B, 1), q.shape

    # Tight check vs a reference with the same compute path, loose check vs
    # pure-f32 reference (covers bf16 quantization of weights/activations).
    q_matched = critic_reference_matched(state, action, params, ep_dtype)
    q_f32 = critic_reference_f32(state, action, params)
    assert jnp.allclose(q, q_matched, atol=2e-3, rtol=1e-2), \
        "mismatch vs matched (bf16-path) reference"
    assert jnp.allclose(q, q_f32, atol=5e-3, rtol=3e-2), \
        "mismatch vs f32 reference"

    print("KERNEL_OK")
</pallas_src>

<mosaic_0001>
module attributes {stable_mosaic.version = 11 : i64} {
  func.func @critic_kernel(%arg0: i32, %arg1: memref<64x24xbf16, #tpu.memory_space<vmem>>, %arg2: memref<64x4xbf16, #tpu.memory_space<vmem>>, %arg3: memref<24x256xbf16, #tpu.memory_space<vmem>>, %arg4: memref<256x256xbf16, #tpu.memory_space<vmem>>, %arg5: memref<4x256xbf16, #tpu.memory_space<vmem>>, %arg6: memref<256x128xbf16, #tpu.memory_space<vmem>>, %arg7: memref<1x128xbf16, #tpu.memory_space<vmem>>, %arg8: memref<4x256xf32, #tpu.memory_space<vmem>>, %arg9: memref<1x64xf32, #tpu.memory_space<vmem>>) attributes {dimension_semantics = [#tpu.dimension_semantics<parallel>], iteration_bounds = array<i64: 1>, scalar_prefetch = 0 : i64, scratch_operands = 0 : i64, tpu.core_type = #tpu.core_type<tc>, window_params = [{transform_indices = @transform_0, window_bounds = array<i64: 64, 24>}, {transform_indices = @transform_1, window_bounds = array<i64: 64, 4>}, {pipeline_mode = #tpu.pipeline_mode<synchronous>, transform_indices = @transform_2, window_bounds = array<i64: 24, 256>}, {pipeline_mode = #tpu.pipeline_mode<synchronous>, transform_indices = @transform_3, window_bounds = array<i64: 256, 256>}, {pipeline_mode = #tpu.pipeline_mode<synchronous>, transform_indices = @transform_4, window_bounds = array<i64: 4, 256>}, {pipeline_mode = #tpu.pipeline_mode<synchronous>, transform_indices = @transform_5, window_bounds = array<i64: 256, 128>}, {pipeline_mode = #tpu.pipeline_mode<synchronous>, transform_indices = @transform_6, window_bounds = array<i64: 1, 128>}, {pipeline_mode = #tpu.pipeline_mode<synchronous>, transform_indices = @transform_7, window_bounds = array<i64: 4, 256>}, {transform_indices = @transform_8, window_bounds = array<i64: 1, 64>}]} {
    %c0 = arith.constant 0 : index
    %c0_0 = arith.constant 0 : index
    %0 = vector.load %arg8[%c0, %c0_0] : memref<4x256xf32, #tpu.memory_space<vmem>>, vector<1x256xf32>
    %c1 = arith.constant 1 : index
    %c0_1 = arith.constant 0 : index
    %1 = vector.load %arg8[%c1, %c0_1] : memref<4x256xf32, #tpu.memory_space<vmem>>, vector<1x256xf32>
    %c2 = arith.constant 2 : index
    %c0_2 = arith.constant 0 : index
    %2 = vector.load %arg8[%c2, %c0_2] : memref<4x256xf32, #tpu.memory_space<vmem>>, vector<1x128xf32>
    %c3 = arith.constant 3 : index
    %c0_3 = arith.constant 0 : index
    %3 = vector.load %arg8[%c3, %c0_3] : memref<4x256xf32, #tpu.memory_space<vmem>>, vector<1x1xf32>
    %c0_4 = arith.constant 0 : index
    %c0_5 = arith.constant 0 : index
    %4 = vector.load %arg1[%c0_4, %c0_5] : memref<64x24xbf16, #tpu.memory_space<vmem>>, vector<64x24xbf16>
    %c0_6 = arith.constant 0 : index
    %c0_7 = arith.constant 0 : index
    %5 = vector.load %arg3[%c0_6, %c0_7] : memref<24x256xbf16, #tpu.memory_space<vmem>>, vector<24x256xbf16>
    %cst = arith.constant dense<0.000000e+00> : vector<64x256xf32>
    %6 = tpu.matmul %4, %5, %cst {dimension_numbers = #tpu.dot_dimension_numbers<[1], [0], [0], [1], [0, 0, 1, 1], [], []>} : vector<64x24xbf16>, vector<24x256xbf16>, vector<64x256xf32> -> vector<64x256xf32>
    %7 = vector.broadcast %0 : vector<1x256xf32> to vector<64x256xf32>
    %8 = arith.addf %6, %7 : vector<64x256xf32>
    %cst_8 = arith.constant 0.00999999977 : f32
    %9 = vector.broadcast %cst_8 : f32 to vector<64x256xf32>
    %10 = arith.mulf %9, %8 : vector<64x256xf32>
    %11 = arith.maximumf %8, %10 : vector<64x256xf32>
    %12 = arith.truncf %11 : vector<64x256xf32> to vector<64x256xbf16>
    %c0_9 = arith.constant 0 : index
    %c0_10 = arith.constant 0 : index
    %13 = vector.load %arg4[%c0_9, %c0_10] : memref<256x256xbf16, #tpu.memory_space<vmem>>, vector<256x256xbf16>
    %cst_11 = arith.constant dense<0.000000e+00> : vector<64x256xf32>
    %14 = tpu.matmul %12, %13, %cst_11 {dimension_numbers = #tpu.dot_dimension_numbers<[1], [0], [0], [1], [0, 0, 1, 1], [], []>} : vector<64x256xbf16>, vector<256x256xbf16>, vector<64x256xf32> -> vector<64x256xf32>
    %c0_12 = arith.constant 0 : index
    %c0_13 = arith.constant 0 : index
    %15 = vector.load %arg2[%c0_12, %c0_13] : memref<64x4xbf16, #tpu.memory_space<vmem>>, vector<64x4xbf16>
    %c0_14 = arith.constant 0 : index
    %c0_15 = arith.constant 0 : index
    %16 = vector.load %arg5[%c0_14, %c0_15] : memref<4x256xbf16, #tpu.memory_space<vmem>>, vector<4x256xbf16>
    %cst_16 = arith.constant dense<0.000000e+00> : vector<64x256xf32>
    %17 = tpu.matmul %15, %16, %cst_16 {dimension_numbers = #tpu.dot_dimension_numbers<[1], [0], [0], [1], [0, 0, 1, 1], [], []>} : vector<64x4xbf16>, vector<4x256xbf16>, vector<64x256xf32> -> vector<64x256xf32>
    %18 = arith.addf %14, %17 : vector<64x256xf32>
    %19 = vector.broadcast %1 : vector<1x256xf32> to vector<64x256xf32>
    %20 = arith.addf %18, %19 : vector<64x256xf32>
    %cst_17 = arith.constant 0.00999999977 : f32
    %21 = vector.broadcast %cst_17 : f32 to vector<64x256xf32>
    %22 = arith.mulf %21, %20 : vector<64x256xf32>
    %23 = arith.maximumf %20, %22 : vector<64x256xf32>
    %24 = arith.truncf %23 : vector<64x256xf32> to vector<64x256xbf16>
    %c0_18 = arith.constant 0 : index
    %c0_19 = arith.constant 0 : index
    %25 = vector.load %arg6[%c0_18, %c0_19] : memref<256x128xbf16, #tpu.memory_space<vmem>>, vector<256x128xbf16>
    %cst_20 = arith.constant dense<0.000000e+00> : vector<64x128xf32>
    %26 = tpu.matmul %24, %25, %cst_20 {dimension_numbers = #tpu.dot_dimension_numbers<[1], [0], [0], [1], [0, 0, 1, 1], [], []>} : vector<64x256xbf16>, vector<256x128xbf16>, vector<64x128xf32> -> vector<64x128xf32>
    %27 = vector.broadcast %2 : vector<1x128xf32> to vector<64x128xf32>
    %28 = arith.addf %26, %27 : vector<64x128xf32>
    %cst_21 = arith.constant 0.00999999977 : f32
    %29 = vector.broadcast %cst_21 : f32 to vector<64x128xf32>
    %30 = arith.mulf %29, %28 : vector<64x128xf32>
    %31 = arith.maximumf %28, %30 : vector<64x128xf32>
    %c0_22 = arith.constant 0 : index
    %c0_23 = arith.constant 0 : index
    %32 = vector.load %arg7[%c0_22, %c0_23] : memref<1x128xbf16, #tpu.memory_space<vmem>>, vector<1x128xbf16>
    %33 = arith.truncf %31 : vector<64x128xf32> to vector<64x128xbf16>
    %cst_24 = arith.constant dense<0.000000e+00> : vector<1x64xf32>
    %34 = tpu.matmul %32, %33, %cst_24 {dimension_numbers = #tpu.dot_dimension_numbers<[1], [1], [0], [0], [0, 0, 1, 0], [], []>} : vector<1x128xbf16>, vector<64x128xbf16>, vector<1x64xf32> -> vector<1x64xf32>
    %35 = vector.broadcast %3 : vector<1x1xf32> to vector<1x64xf32>
    %36 = arith.addf %34, %35 : vector<1x64xf32>
    %c0_25 = arith.constant 0 : index
    %c0_26 = arith.constant 0 : index
    %37 = vector.load %arg9[%c0_25, %c0_26] : memref<1x64xf32, #tpu.memory_space<vmem>>, vector<1x64xf32>
    tpu.vector_store %arg9[%c0_25, %c0_26], %36 {strides = array<i32>} : memref<1x64xf32, #tpu.memory_space<vmem>>, vector<1x64xf32>,
    return
  }
  func.func @transform_0(%arg0: i32) -> (i32, i32) {
    %c0_i32 = arith.constant 0 : i32
    %c0_i32_0 = arith.constant 0 : i32
    return %arg0, %c0_i32 : i32, i32
  }
  func.func @transform_1(%arg0: i32) -> (i32, i32) {
    %c0_i32 = arith.constant 0 : i32
    %c0_i32_0 = arith.constant 0 : i32
    return %arg0, %c0_i32 : i32, i32
  }
  func.func @transform_2(%arg0: i32) -> (i32, i32) {
    %c0_i32 = arith.constant 0 : i32
    %c0_i32_0 = arith.constant 0 : i32
    %c0_i32_1 = arith.constant 0 : i32
    return %c0_i32, %c0_i32_0 : i32, i32
  }
  func.func @transform_3(%arg0: i32) -> (i32, i32) {
    %c0_i32 = arith.constant 0 : i32
    %c0_i32_0 = arith.constant 0 : i32
    %c0_i32_1 = arith.constant 0 : i32
    return %c0_i32, %c0_i32_0 : i32, i32
  }
  func.func @transform_4(%arg0: i32) -> (i32, i32) {
    %c0_i32 = arith.constant 0 : i32
    %c0_i32_0 = arith.constant 0 : i32
    %c0_i32_1 = arith.constant 0 : i32
    return %c0_i32, %c0_i32_0 : i32, i32
  }
  func.func @transform_5(%arg0: i32) -> (i32, i32) {
    %c0_i32 = arith.constant 0 : i32
    %c0_i32_0 = arith.constant 0 : i32
    %c0_i32_1 = arith.constant 0 : i32
    return %c0_i32, %c0_i32_0 : i32, i32
  }
  func.func @transform_6(%arg0: i32) -> (i32, i32) {
    %c0_i32 = arith.constant 0 : i32
    %c0_i32_0 = arith.constant 0 : i32
    %c0_i32_1 = arith.constant 0 : i32
    return %c0_i32, %c0_i32_0 : i32, i32
  }
  func.func @transform_7(%arg0: i32) -> (i32, i32) {
    %c0_i32 = arith.constant 0 : i32
    %c0_i32_0 = arith.constant 0 : i32
    %c0_i32_1 = arith.constant 0 : i32
    return %c0_i32, %c0_i32_0 : i32, i32
  }
  func.func @transform_8(%arg0: i32) -> (i32, i32) {
    %c0_i32 = arith.constant 0 : i32
    %c0_i32_0 = arith.constant 0 : i32
    return %c0_i32, %arg0 : i32, i32
  }
}

</mosaic_0001>

<llo_original>
// kernel: tpu_custom_call.1
$region0: #{tpu_custom_call.1}
  #allocation0 [shape = 'u32[]', space=smem, size = 0x4, offset = 0x4, fixed_abs, tag = 'smem constant byte address 0x4 - core index']
  #allocation1 [shape = 'u32[144,128]{1,0:T(1,128)}', space=vmem, size = 0x12000, scoped, tag = 'internal scratch']
  %s0 = inlined_call_operand.vmem [shape: bf16[64,24], index: 0, kind: input, shape index: {}]
  %s1 = inlined_call_operand.vmem [shape: bf16[64,4], index: 1, kind: input, shape index: {}]
  %s2 = inlined_call_operand.vmem [shape: bf16[24,256], index: 2, kind: input, shape index: {}]
  %s3 = inlined_call_operand.hbm [shape: bf16[256,256], index: 3, kind: input, shape index: {}]
  %s4 = inlined_call_operand.vmem [shape: bf16[4,256], index: 4, kind: input, shape index: {}]
  %s5 = inlined_call_operand.hbm [shape: bf16[256,128], index: 5, kind: input, shape index: {}]
  %s6 = inlined_call_operand.vmem [shape: bf16[1,128], index: 6, kind: input, shape index: {}]
  %s7 = inlined_call_operand.vmem [shape: f32[4,256], index: 7, kind: input, shape index: {}]
  %s8 = inlined_call_operand.hbm [shape: f32[1,64], index: 8, kind: output, shape index: {}]
  %s9 = sld [smem:[#allocation0]]
  $region50: #{tpu_custom_call.1} parent=0
    _
  %s11 = ssub.s32 1, %s9
  %s12 = scalar_select 0, %s11, %s9
  $region1: #{tpu_custom_call.1} parent=0
    #allocation2 [shape = 'u8[131072]{0}', space=vmem, size = 0x20000, scoped, tag = 'input window, operand 3, single buffered']
    #allocation3 [shape = 's32[1]{0}', space=sflag, size = 0x4, scoped, tag = 'scoped memory for tpu_custom_call.1']
    #allocation4 [shape = 's32[1]{0}', space=sflag, size = 0x4, scoped, tag = 'scoped memory for tpu_custom_call.1']
    #allocation5 [shape = 'u8[65536]{0}', space=vmem, size = 0x10000, scoped, tag = 'input window, operand 5, single buffered']
    #allocation6 [shape = 's32[1]{0}', space=sflag, size = 0x4, scoped, tag = 'scoped memory for tpu_custom_call.1']
    #allocation7 [shape = 'u8[512]{0}', space=vmem, size = 0x400, scoped, tag = 'output window, operand 0, single buffered']
    %13 = vsyncpa [#allocation3], 0
    %14 = vsyncpa [#allocation6], 0
    %15 = vsyncpa [#allocation4], 0
    // Predicated region
    $region2: #{tpu_custom_call.1} parent=1 // pred_check
      _
    $region3: #{tpu_custom_call.1} parent=1 // pred_check_branch
      %17 = sbr.rel (0) target = $region5
    $region4: #{tpu_custom_call.1} parent=1 // pred_region
      _
    $region5: #{tpu_custom_call.1} parent=1 // pred_fallthru
      _
    // Predicated region
    $region6: #{tpu_custom_call.1} parent=1 // pred_check
      _
    $region7: #{tpu_custom_call.1} parent=1 // pred_check_branch
      %19 = sbr.rel (0) target = $region9
    $region8: #{tpu_custom_call.1} parent=1 // pred_region
      _
    $region9: #{tpu_custom_call.1} parent=1 // pred_fallthru
      _
    // Predicated region
    $region10: #{tpu_custom_call.1} parent=1 // pred_check
      _
    $region11: #{tpu_custom_call.1} parent=1 // pred_check_branch
      %21 = sbr.rel (0) target = $region13
    $region12: #{tpu_custom_call.1} parent=1 // pred_region
      _
    $region13: #{tpu_custom_call.1} parent=1 // pred_fallthru
      _
    // Predicated region
    $region14: #{tpu_custom_call.1} parent=1 // pred_check
      _
    $region15: #{tpu_custom_call.1} parent=1 // pred_check_branch
      %23 = sbr.rel (0) target = $region17
    $region16: #{tpu_custom_call.1} parent=1 // pred_region
      %s25 = ssub.s32 4096, 4096
      %26 = vsyncadd [#allocation3], %s25
      %s27 = sshll.u32 [#allocation2], 4
      %s28 = int_to_ptr.vmem [resolvable:$true] %s27
      %33 = dma.hbm_to_vmem [thread:$0]  %s3, 4096, %s28, [#allocation3], 128, 128, 8
    $region17: #{tpu_custom_call.1} parent=1 // pred_fallthru
      _
    // Predicated region
    $region18: #{tpu_custom_call.1} parent=1 // pred_check
      _
    $region19: #{tpu_custom_call.1} parent=1 // pred_check_branch
      %35 = sbr.rel (0) target = $region21
    $region20: #{tpu_custom_call.1} parent=1 // pred_region
      _
    $region21: #{tpu_custom_call.1} parent=1 // pred_fallthru
      _
    // Predicated region
    $region22: #{tpu_custom_call.1} parent=1 // pred_check
      _
    $region23: #{tpu_custom_call.1} parent=1 // pred_check_branch
      %37 = sbr.rel (0) target = $region25
    $region24: #{tpu_custom_call.1} parent=1 // pred_region
      %s39 = ssub.s32 2048, 2048
      %40 = vsyncadd [#allocation6], %s39
      %s41 = sshll.u32 [#allocation5], 4
      %s42 = int_to_ptr.vmem [resolvable:$true] %s41
      %47 = dma.hbm_to_vmem [thread:$0]  %s5, 2048, %s42, [#allocation6], 64, 64, 4
    $region25: #{tpu_custom_call.1} parent=1 // pred_fallthru
      _
    // Predicated region
    $region26: #{tpu_custom_call.1} parent=1 // pred_check
      _
    $region27: #{tpu_custom_call.1} parent=1 // pred_check_branch
      %49 = sbr.rel (0) target = $region29
    $region28: #{tpu_custom_call.1} parent=1 // pred_region
      _
    $region29: #{tpu_custom_call.1} parent=1 // pred_fallthru
      _
    // Predicated region
    $region30: #{tpu_custom_call.1} parent=1 // pred_check
      _
    $region31: #{tpu_custom_call.1} parent=1 // pred_check_branch
      %51 = sbr.rel (0) target = $region33
    $region32: #{tpu_custom_call.1} parent=1 // pred_region
      _
    $region33: #{tpu_custom_call.1} parent=1 // pred_fallthru
      _
    // Predicated region
    $region34: #{tpu_custom_call.1} parent=1 // pred_check
      _
    $region35: #{tpu_custom_call.1} parent=1 // pred_check_branch
      %53 = sbr.rel (0) target = $region37
    $region36: #{tpu_custom_call.1} parent=1 // pred_region
      %54 = dma.done [#allocation3], 4096
    $region37: #{tpu_custom_call.1} parent=1 // pred_fallthru
      _
    // Predicated region
    $region38: #{tpu_custom_call.1} parent=1 // pred_check
      _
    $region39: #{tpu_custom_call.1} parent=1 // pred_check_branch
      %56 = sbr.rel (0) target = $region41
    $region40: #{tpu_custom_call.1} parent=1 // pred_region
      %57 = dma.done [#allocation6], 2048
    $region41: #{tpu_custom_call.1} parent=1 // pred_fallthru
      _
    %v59 = vld [vmem:[%s7] ss:$4 sm:$0x3]
    %s60 = scalar_lea.vmem %s7, 1
    %v61 = vld [vmem:[%s60] ss:$4 sm:$0x3]
    %v62 = vld [vmem:[%s7 + $0x2] sm:$0x1]
    %v63 = vld [vmem:[%s7 + $0x3] sm:$0x1]
    %v64 = vld [vmem:[%s0] sm:$0xf]
    %v65 = vld [vmem:[%s0 + $0x4] sm:$0xf]
    %v66 = vld [vmem:[%s0 + $0x8] sm:$0xf]
    %v67 = vld [vmem:[%s0 + $0xc] sm:$0xf]
    %v68 = vld [vmem:[%s0 + $0x10] sm:$0xf]
    %v69 = vld [vmem:[%s0 + $0x14] sm:$0xf]
    %v70 = vld [vmem:[%s0 + $0x18] sm:$0xf]
    %v71 = vld [vmem:[%s0 + $0x1c] sm:$0xf]
    %v72 = vld [vmem:[%s2] sm:$0xff]
    %v73 = vld [vmem:[%s2 + $0x8] sm:$0xff]
    %v74 = vld [vmem:[%s2 + $0x10] sm:$0xff]
    %v76 = vlaneseq
    %v77 = vshrl.u32 %v76, 7
    %v78 = vsub.s32 0, %v77
    %v79 = vrot.slane %v59, %v78
    %v80 = vlaneseq
    %v81 = vshrl.u32 %v80, 7
    %v82 = vsub.s32 1, %v81
    %v83 = vrot.slane %v59, %v82
    %v94 = vunpack.c.l.b16 %v64
    %v95 = vunpack.c.l.b16 %v65
    %v96 = vunpack.c.l.b16 %v66
    %v97 = vunpack.c.l.b16 %v67
    %v98 = vunpack.c.l.b16 %v68
    %v99 = vunpack.c.l.b16 %v69
    %v100 = vunpack.c.l.b16 %v70
    %v101 = vunpack.c.l.b16 %v71
    %v102 = vpack.c.b16 %v95, %v94
    %v103 = vpack.c.b16 %v97, %v96
    %v104 = vpack.c.b16 %v99, %v98
    %v105 = vpack.c.b16 %v101, %v100
    %v109 = vunpack.c.l.b16 %v72
    %v110 = vunpack.c.h.b16 %v72
    %v111 = vunpack.c.l.b16 %v73
    %v112 = vunpack.c.h.b16 %v73
    %v113 = vunpack.c.l.b16 %v74
    %v114 = vunpack.c.h.b16 %v74
    %v115 = vpack.c.b16 %v111, %v109
    %v116 = vpack.c.b16 %v112, %v110
    %v117 = vpack.c.b16 %v113, %v113
    %v118 = vpack.c.b16 %v114, %v114
    %vm121 = vcmask 195584
    %v123 = vsel %vm121, %v102, 0
    %v126 = vsel %vm121, %v103, 0
    %v129 = vsel %vm121, %v104, 0
    %v132 = vsel %vm121, %v105, 0
    %vm134 = vcmask 1043456
    %v136 = vsel %vm134, %v117, 0
    %v139 = vsel %vm134, %v118, 0
    %141 = vmatprep.subr.bf16.mxu0 0
    %142 = vmatpush1.bf16.msra.mxu0 0
    %143 = vmatprep.subr.bf16.mxu0 0
    %144 = vmatpush1.bf16.msra.mxu0 0
    %145 = vmatprep.subr.bf16.mxu0 0
    %146 = vmatpush1.bf16.msra.mxu0 0
    %147 = vmatprep.subr.bf16.mxu0 0
    %148 = vmatpush1.bf16.msra.mxu0 0
    %149 = vmatprep.subr.bf16.mxu0 0
    %150 = vmatpush1.bf16.msra.mxu0 0
    %151 = vmatprep.subr.bf16.mxu0 0
    %152 = vmatpush1.bf16.msra.mxu0 0
    %153 = vmatprep.subr.bf16.mxu0 %v139
    %154 = vmatpush1.bf16.msra.mxu0 %v136
    %155 = vmatprep.subr.bf16.mxu0 %v116
    %156 = vmatpush1.bf16.msra.mxu0 %v115
    %157 = vmatprep.subr.bf16.mxu0 0
    %158 = vmatpush2.bf16.msra.mxu0 0
    %159 = vmatprep.subr.bf16.mxu0 0
    %160 = vmatpush2.bf16.msra.mxu0 0
    %161 = vmatprep.subr.bf16.mxu0 0
    %162 = vmatpush2.bf16.msra.mxu0 0
    %163 = vmatprep.subr.bf16.mxu0 0
    %164 = vmatpush2.bf16.msra.mxu0 0
    %165 = vmatprep.subr.bf16.mxu0 0
    %166 = vmatpush2.bf16.msra.mxu0 0
    %167 = vmatprep.subr.bf16.mxu0 0
    %168 = vmatpush2.bf16.msra.mxu0 0
    %169 = vmatprep.subr.bf16.mxu0 0
    %170 = vmatpush2.bf16.msra.mxu0 0
    %171 = vmatprep.subr.bf16.mxu0 0
    %172 = vmatpush2.bf16.msra.mxu0 0
    %173 = vmatprep.mubr.bf16.mxu0 0
    %174 = vmatmul.mubr.bf16.gmra.mxu0 %v123
    %v175 = vpop.f32.mrf.mxu0
    %v176 = vadd.f32 %v79, %v175
    %v177 = vpop.f32.mrf.mxu0
    %v178 = vadd.f32 %v83, %v177
    %v179 = vpop.f32.mrf.mxu0
    %v180 = vadd.f32 %v79, %v179
    %v181 = vpop.f32.mrf.mxu0
    %v182 = vadd.f32 %v83, %v181
    %183 = vmatprep.mubr.bf16.mxu0 0
    %184 = vmatmul.mubr.bf16.gmra.mxu0 %v126
    %v185 = vpop.f32.mrf.mxu0
    %v186 = vadd.f32 %v79, %v185
    %v187 = vpop.f32.mrf.mxu0
    %v188 = vadd.f32 %v83, %v187
    %v189 = vpop.f32.mrf.mxu0
    %v190 = vadd.f32 %v79, %v189
    %v191 = vpop.f32.mrf.mxu0
    %v192 = vadd.f32 %v83, %v191
    %193 = vmatprep.mubr.bf16.mxu0 0
    %194 = vmatmul.mubr.bf16.gmra.mxu0 %v129
    %v195 = vpop.f32.mrf.mxu0
    %v196 = vadd.f32 %v79, %v195
    %v197 = vpop.f32.mrf.mxu0
    %v198 = vadd.f32 %v83, %v197
    %v199 = vpop.f32.mrf.mxu0
    %v200 = vadd.f32 %v79, %v199
    %v201 = vpop.f32.mrf.mxu0
    %v202 = vadd.f32 %v83, %v201
    %203 = vmatprep.mubr.bf16.mxu0 0
    %204 = vmatmul.mubr.bf16.gmra.mxu0 %v132
    %v205 = vpop.f32.mrf.mxu0
    %v206 = vadd.f32 %v79, %v205
    %v207 = vpop.f32.mrf.mxu0
    %v208 = vadd.f32 %v83, %v207
    %v209 = vpop.f32.mrf.mxu0
    %v210 = vadd.f32 %v79, %v209
    %v211 = vpop.f32.mrf.mxu0
    %v212 = vadd.f32 %v83, %v211
    %213 = vdwg.mxu0
    %v214 = vmul.f32 %v176, 0.01
    %v215 = vmul.f32 %v178, 0.01
    %v216 = vmul.f32 %v180, 0.01
    %v217 = vmul.f32 %v182, 0.01
    %v218 = vmul.f32 %v186, 0.01
    %v219 = vmul.f32 %v188, 0.01
    %v220 = vmul.f32 %v190, 0.01
    %v221 = vmul.f32 %v192, 0.01
    %v222 = vmul.f32 %v196, 0.01
    %v223 = vmul.f32 %v198, 0.01
    %v224 = vmul.f32 %v200, 0.01
    %v225 = vmul.f32 %v202, 0.01
    %v226 = vmul.f32 %v206, 0.01
    %v227 = vmul.f32 %v208, 0.01
    %v228 = vmul.f32 %v210, 0.01
    %v229 = vmul.f32 %v212, 0.01
    %v230 = vmax.f32 %v176, %v214
    %v231 = vmax.f32 %v178, %v215
    %v232 = vmax.f32 %v180, %v216
    %v233 = vmax.f32 %v182, %v217
    %v234 = vmax.f32 %v186, %v218
    %v235 = vmax.f32 %v188, %v219
    %v236 = vmax.f32 %v190, %v220
    %v237 = vmax.f32 %v192, %v221
    %v238 = vmax.f32 %v196, %v222
    %v239 = vmax.f32 %v198, %v223
    %v240 = vmax.f32 %v200, %v224
    %v241 = vmax.f32 %v202, %v225
    %v242 = vmax.f32 %v206, %v226
    %v243 = vmax.f32 %v208, %v227
    %v244 = vmax.f32 %v210, %v228
    %v245 = vmax.f32 %v212, %v229
    %v246 = vpack.c.bf16 %v232, %v230
    %v247 = vpack.c.bf16 %v233, %v231
    %v248 = vpack.c.bf16 %v236, %v234
    %v249 = vpack.c.bf16 %v237, %v235
    %v250 = vpack.c.bf16 %v240, %v238
    %v251 = vpack.c.bf16 %v241, %v239
    %v252 = vpack.c.bf16 %v244, %v242
    %v253 = vpack.c.bf16 %v245, %v243
    %v254 = vld [vmem:[#allocation2] sm:$0xff]
    %v255 = vld [vmem:[#allocation2 + $0x8] sm:$0xff]
    %v256 = vld [vmem:[#allocation2 + $0x10] sm:$0xff]
    %v257 = vld [vmem:[#allocation2 + $0x18] sm:$0xff]
    %v258 = vld [vmem:[#allocation2 + $0x20] sm:$0xff]
    %v259 = vld [vmem:[#allocation2 + $0x28] sm:$0xff]
    %v260 = vld [vmem:[#allocation2 + $0x30] sm:$0xff]
    %v261 = vld [vmem:[#allocation2 + $0x38] sm:$0xff]
    %v262 = vld [vmem:[#allocation2 + $0x40] sm:$0xff]
    %v263 = vld [vmem:[#allocation2 + $0x48] sm:$0xff]
    %v264 = vld [vmem:[#allocation2 + $0x50] sm:$0xff]
    %v265 = vld [vmem:[#allocation2 + $0x58] sm:$0xff]
    %v266 = vld [vmem:[#allocation2 + $0x60] sm:$0xff]
    %v267 = vld [vmem:[#allocation2 + $0x68] sm:$0xff]
    %v268 = vld [vmem:[#allocation2 + $0x70] sm:$0xff]
    %v269 = vld [vmem:[#allocation2 + $0x78] sm:$0xff]
    %v270 = vld [vmem:[#allocation2 + $0x80] sm:$0xff]
    %v271 = vld [vmem:[#allocation2 + $0x88] sm:$0xff]
    %v272 = vld [vmem:[#allocation2 + $0x90] sm:$0xff]
    %v273 = vld [vmem:[#allocation2 + $0x98] sm:$0xff]
    %v274 = vld [vmem:[#allocation2 + $0xa0] sm:$0xff]
    %v275 = vld [vmem:[#allocation2 + $0xa8] sm:$0xff]
    %v276 = vld [vmem:[#allocation2 + $0xb0] sm:$0xff]
    %v277 = vld [vmem:[#allocation2 + $0xb8] sm:$0xff]
    %v278 = vld [vmem:[#allocation2 + $0xc0] sm:$0xff]
    %v279 = vld [vmem:[#allocation2 + $0xc8] sm:$0xff]
    %v280 = vld [vmem:[#allocation2 + $0xd0] sm:$0xff]
    %v281 = vld [vmem:[#allocation2 + $0xd8] sm:$0xff]
    %v282 = vld [vmem:[#allocation2 + $0xe0] sm:$0xff]
    %v283 = vld [vmem:[#allocation2 + $0xe8] sm:$0xff]
    %v284 = vld [vmem:[#allocation2 + $0xf0] sm:$0xff]
    %v285 = vld [vmem:[#allocation2 + $0xf8] sm:$0xff]
    %v286 = vld [vmem:[%s1] sm:$0xf]
    %v287 = vld [vmem:[%s1 + $0x4] sm:$0xf]
    %v288 = vld [vmem:[%s1 + $0x8] sm:$0xf]
    %v289 = vld [vmem:[%s1 + $0xc] sm:$0xf]
    %v290 = vld [vmem:[%s1 + $0x10] sm:$0xf]
    %v291 = vld [vmem:[%s1 + $0x14] sm:$0xf]
    %v292 = vld [vmem:[%s1 + $0x18] sm:$0xf]
    %v293 = vld [vmem:[%s1 + $0x1c] sm:$0xf]
    %v294 = vld [vmem:[%s4] sm:$0xf]
    %v303 = vunpack.c.l.b16 %v286
    %v304 = vunpack.c.l.b16 %v287
    %v305 = vunpack.c.l.b16 %v288
    %v306 = vunpack.c.l.b16 %v289
    %v307 = vunpack.c.l.b16 %v290
    %v308 = vunpack.c.l.b16 %v291
    %v309 = vunpack.c.l.b16 %v292
    %v310 = vunpack.c.l.b16 %v293
    %v311 = vpack.c.b16 %v304, %v303
    %v312 = vpack.c.b16 %v306, %v305
    %v313 = vpack.c.b16 %v308, %v307
    %v314 = vpack.c.b16 %v310, %v309
    %v317 = vunpack.c.l.s4 1983009808
    %v318 = vunpack.c.0.s8 %v317
    %v319 = vlaneseq
    %v320 = vshrl.u32 %v319, 7
    %v321 = vsub.s32 %v318, %v320
    %v322 = vrot.slane %v294, %v321
    %v323 = vcombine.high %v322, %v322
    %vm324 = vcmask 31744
    %v326 = vsel %vm324, %v311, 0
    %v329 = vsel %vm324, %v312, 0
    %v332 = vsel %vm324, %v313, 0
    %v335 = vsel %vm324, %v314, 0
    %vm337 = vcmask 1041408
    %v339 = vsel %vm337, %v322, 0
    %v342 = vsel %vm337, %v323, 0
    %344 = vmatprep.subr.bf16.mxu0 0
    %345 = vmatpush1.bf16.msra.mxu0 0
    %346 = vmatprep.subr.bf16.mxu0 0
    %347 = vmatpush1.bf16.msra.mxu0 0
    %348 = vmatprep.subr.bf16.mxu0 0
    %349 = vmatpush1.bf16.msra.mxu0 0
    %350 = vmatprep.subr.bf16.mxu0 0
    %351 = vmatpush1.bf16.msra.mxu0 0
    %352 = vmatprep.subr.bf16.mxu0 0
    %353 = vmatpush1.bf16.msra.mxu0 0
    %354 = vmatprep.subr.bf16.mxu0 0
    %355 = vmatpush1.bf16.msra.mxu0 0
    %356 = vmatprep.subr.bf16.mxu0 0
    %357 = vmatpush1.bf16.msra.mxu0 0
    %358 = vmatprep.subr.bf16.mxu0 %v342
    %359 = vmatpush1.bf16.msra.mxu0 %v339
    %360 = vmatprep.subr.bf16.mxu0 0
    %361 = vmatpush2.bf16.msra.mxu0 0
    %362 = vmatprep.subr.bf16.mxu0 0
    %363 = vmatpush2.bf16.msra.mxu0 0
    %364 = vmatprep.subr.bf16.mxu0 0
    %365 = vmatpush2.bf16.msra.mxu0 0
    %366 = vmatprep.subr.bf16.mxu0 0
    %367 = vmatpush2.bf16.msra.mxu0 0
    %368 = vmatprep.subr.bf16.mxu0 0
    %369 = vmatpush2.bf16.msra.mxu0 0
    %370 = vmatprep.subr.bf16.mxu0 0
    %371 = vmatpush2.bf16.msra.mxu0 0
    %372 = vmatprep.subr.bf16.mxu0 0
    %373 = vmatpush2.bf16.msra.mxu0 0
    %374 = vmatprep.subr.bf16.mxu0 0
    %375 = vmatpush2.bf16.msra.mxu0 0
    %376 = vmatprep.mubr.bf16.mxu0 0
    %377 = vmatmul.mubr.bf16.gmra.mxu0 %v326
    %v378 = vpop.f32.mrf.mxu0
    %v379 = vadd.f32 0.0, %v378
    %v380 = vpop.f32.mrf.mxu0
    %v381 = vadd.f32 0.0, %v380
    %v382 = vpop.f32.mrf.mxu0
    %v383 = vadd.f32 0.0, %v382
    %v384 = vpop.f32.mrf.mxu0
    %v385 = vadd.f32 0.0, %v384
    %386 = vmatprep.mubr.bf16.mxu0 0
    %387 = vmatmul.mubr.bf16.gmra.mxu0 %v329
    %v388 = vpop.f32.mrf.mxu0
    %v389 = vadd.f32 0.0, %v388
    %v390 = vpop.f32.mrf.mxu0
    %v391 = vadd.f32 0.0, %v390
    %v392 = vpop.f32.mrf.mxu0
    %v393 = vadd.f32 0.0, %v392
    %v394 = vpop.f32.mrf.mxu0
    %v395 = vadd.f32 0.0, %v394
    %396 = vmatprep.mubr.bf16.mxu0 0
    %397 = vmatmul.mubr.bf16.gmra.mxu0 %v332
    %v398 = vpop.f32.mrf.mxu0
    %v399 = vadd.f32 0.0, %v398
    %v400 = vpop.f32.mrf.mxu0
    %v401 = vadd.f32 0.0, %v400
    %v402 = vpop.f32.mrf.mxu0
    %v403 = vadd.f32 0.0, %v402
    %v404 = vpop.f32.mrf.mxu0
    %v405 = vadd.f32 0.0, %v404
    %406 = vmatprep.mubr.bf16.mxu0 0
    %407 = vmatmul.mubr.bf16.gmra.mxu0 %v335
    %v408 = vpop.f32.mrf.mxu0
    %v409 = vadd.f32 0.0, %v408
    %v410 = vpop.f32.mrf.mxu0
    %v411 = vadd.f32 0.0, %v410
    %v412 = vpop.f32.mrf.mxu0
    %v413 = vadd.f32 0.0, %v412
    %v414 = vpop.f32.mrf.mxu0
    %v415 = vadd.f32 0.0, %v414
    %416 = vdwg.mxu0
    %v449 = vunpack.c.l.b16 %v254
    %v450 = vunpack.c.h.b16 %v254
    %v451 = vunpack.c.l.b16 %v255
    %v452 = vunpack.c.h.b16 %v255
    %v453 = vunpack.c.l.b16 %v256
    %v454 = vunpack.c.h.b16 %v256
    %v455 = vunpack.c.l.b16 %v257
    %v456 = vunpack.c.h.b16 %v257
    %v457 = vunpack.c.l.b16 %v258
    %v458 = vunpack.c.h.b16 %v258
    %v459 = vunpack.c.l.b16 %v259
    %v460 = vunpack.c.h.b16 %v259
    %v461 = vunpack.c.l.b16 %v260
    %v462 = vunpack.c.h.b16 %v260
    %v463 = vunpack.c.l.b16 %v261
    %v464 = vunpack.c.h.b16 %v261
    %v465 = vunpack.c.l.b16 %v262
    %v466 = vunpack.c.h.b16 %v262
    %v467 = vunpack.c.l.b16 %v263
    %v468 = vunpack.c.h.b16 %v263
    %v469 = vunpack.c.l.b16 %v264
    %v470 = vunpack.c.h.b16 %v264
    %v471 = vunpack.c.l.b16 %v265
    %v472 = vunpack.c.h.b16 %v265
    %v473 = vunpack.c.l.b16 %v266
    %v474 = vunpack.c.h.b16 %v266
    %v475 = vunpack.c.l.b16 %v267
    %v476 = vunpack.c.h.b16 %v267
    %v477 = vunpack.c.l.b16 %v268
    %v478 = vunpack.c.h.b16 %v268
    %v479 = vunpack.c.l.b16 %v269
    %v480 = vunpack.c.h.b16 %v269
    %v481 = vunpack.c.l.b16 %v270
    %v482 = vunpack.c.h.b16 %v270
    %v483 = vunpack.c.l.b16 %v271
    %v484 = vunpack.c.h.b16 %v271
    %v485 = vunpack.c.l.b16 %v272
    %v486 = vunpack.c.h.b16 %v272
    %v487 = vunpack.c.l.b16 %v273
    %v488 = vunpack.c.h.b16 %v273
    %v489 = vunpack.c.l.b16 %v274
    %v490 = vunpack.c.h.b16 %v274
    %v491 = vunpack.c.l.b16 %v275
    %v492 = vunpack.c.h.b16 %v275
    %v493 = vunpack.c.l.b16 %v276
    %v494 = vunpack.c.h.b16 %v276
    %v495 = vunpack.c.l.b16 %v277
    %v496 = vunpack.c.h.b16 %v277
    %v497 = vunpack.c.l.b16 %v278
    %v498 = vunpack.c.h.b16 %v278
    %v499 = vunpack.c.l.b16 %v279
    %v500 = vunpack.c.h.b16 %v279
    %v501 = vunpack.c.l.b16 %v280
    %v502 = vunpack.c.h.b16 %v280
    %v503 = vunpack.c.l.b16 %v281
    %v504 = vunpack.c.h.b16 %v281
    %v505 = vunpack.c.l.b16 %v282
    %v506 = vunpack.c.h.b16 %v282
    %v507 = vunpack.c.l.b16 %v283
    %v508 = vunpack.c.h.b16 %v283
    %v509 = vunpack.c.l.b16 %v284
    %v510 = vunpack.c.h.b16 %v284
    %v511 = vunpack.c.l.b16 %v285
    %v512 = vunpack.c.h.b16 %v285
    %v513 = vpack.c.b16 %v451, %v449
    %v514 = vpack.c.b16 %v452, %v450
    %v515 = vpack.c.b16 %v455, %v453
    %v516 = vpack.c.b16 %v456, %v454
    %v517 = vpack.c.b16 %v459, %v457
    %v518 = vpack.c.b16 %v460, %v458
    %v519 = vpack.c.b16 %v463, %v461
    %v520 = vpack.c.b16 %v464, %v462
    %v521 = vpack.c.b16 %v467, %v465
    %v522 = vpack.c.b16 %v468, %v466
    %v523 = vpack.c.b16 %v471, %v469
    %v524 = vpack.c.b16 %v472, %v470
    %v525 = vpack.c.b16 %v475, %v473
    %v526 = vpack.c.b16 %v476, %v474
    %v527 = vpack.c.b16 %v479, %v477
    %v528 = vpack.c.b16 %v480, %v478
    %v529 = vpack.c.b16 %v483, %v481
    %v530 = vpack.c.b16 %v484, %v482
    %v531 = vpack.c.b16 %v487, %v485
    %v532 = vpack.c.b16 %v488, %v486
    %v533 = vpack.c.b16 %v491, %v489
    %v534 = vpack.c.b16 %v492, %v490
    %v535 = vpack.c.b16 %v495, %v493
    %v536 = vpack.c.b16 %v496, %v494
    %v537 = vpack.c.b16 %v499, %v497
    %v538 = vpack.c.b16 %v500, %v498
    %v539 = vpack.c.b16 %v503, %v501
    %v540 = vpack.c.b16 %v504, %v502
    %v541 = vpack.c.b16 %v507, %v505
    %v542 = vpack.c.b16 %v508, %v506
    %v543 = vpack.c.b16 %v511, %v509
    %v544 = vpack.c.b16 %v512, %v510
    %577 = vmatprep.subr.bf16.mxu0 %v528
    %578 = vmatpush1.bf16.msra.mxu0 %v527
    %579 = vmatprep.subr.bf16.mxu0 %v526
    %580 = vmatpush1.bf16.msra.mxu0 %v525
    %581 = vmatprep.subr.bf16.mxu0 %v524
    %582 = vmatpush1.bf16.msra.mxu0 %v523
    %583 = vmatprep.subr.bf16.mxu0 %v522
    %584 = vmatpush1.bf16.msra.mxu0 %v521
    %585 = vmatprep.subr.bf16.mxu0 %v520
    %586 = vmatpush1.bf16.msra.mxu0 %v519
    %587 = vmatprep.subr.bf16.mxu0 %v518
    %588 = vmatpush1.bf16.msra.mxu0 %v517
    %589 = vmatprep.subr.bf16.mxu0 %v516
    %590 = vmatpush1.bf16.msra.mxu0 %v515
    %591 = vmatprep.subr.bf16.mxu0 %v514
    %592 = vmatpush1.bf16.msra.mxu0 %v513
    %593 = vmatprep.subr.bf16.mxu0 %v544
    %594 = vmatpush2.bf16.msra.mxu0 %v543
    %595 = vmatprep.subr.bf16.mxu0 %v542
    %596 = vmatpush2.bf16.msra.mxu0 %v541
    %597 = vmatprep.subr.bf16.mxu0 %v540
    %598 = vmatpush2.bf16.msra.mxu0 %v539
    %599 = vmatprep.subr.bf16.mxu0 %v538
    %600 = vmatpush2.bf16.msra.mxu0 %v537
    %601 = vmatprep.subr.bf16.mxu0 %v536
    %602 = vmatpush2.bf16.msra.mxu0 %v535
    %603 = vmatprep.subr.bf16.mxu0 %v534
    %604 = vmatpush2.bf16.msra.mxu0 %v533
    %605 = vmatprep.subr.bf16.mxu0 %v532
    %606 = vmatpush2.bf16.msra.mxu0 %v531
    %607 = vmatprep.subr.bf16.mxu0 %v530
    %608 = vmatpush2.bf16.msra.mxu0 %v529
    %609 = vmatprep.mubr.bf16.mxu0 %v247
    %610 = vmatmul.mubr.bf16.gmra.mxu0 %v246
    %v611 = vpop.f32.mrf.mxu0
    %v612 = vadd.f32 %v379, %v611
    %v613 = vpop.f32.mrf.mxu0
    %v614 = vadd.f32 %v381, %v613
    %v615 = vpop.f32.mrf.mxu0
    %v616 = vadd.f32 %v383, %v615
    %v617 = vpop.f32.mrf.mxu0
    %v618 = vadd.f32 %v385, %v617
    %619 = vmatprep.mubr.bf16.mxu0 %v249
    %620 = vmatmul.mubr.bf16.gmra.mxu0 %v248
    %v621 = vpop.f32.mrf.mxu0
    %v622 = vadd.f32 %v389, %v621
    %v623 = vpop.f32.mrf.mxu0
    %v624 = vadd.f32 %v391, %v623
    %v625 = vpop.f32.mrf.mxu0
    %v626 = vadd.f32 %v393, %v625
    %v627 = vpop.f32.mrf.mxu0
    %v628 = vadd.f32 %v395, %v627
    %629 = vmatprep.mubr.bf16.mxu0 %v251
    %630 = vmatmul.mubr.bf16.gmra.mxu0 %v250
    %v631 = vpop.f32.mrf.mxu0
    %v632 = vadd.f32 %v399, %v631
    %v633 = vpop.f32.mrf.mxu0
    %v634 = vadd.f32 %v401, %v633
    %v635 = vpop.f32.mrf.mxu0
    %v636 = vadd.f32 %v403, %v635
    %v637 = vpop.f32.mrf.mxu0
    %v638 = vadd.f32 %v405, %v637
    %639 = vmatprep.mubr.bf16.mxu0 %v253
    %640 = vmatmul.mubr.bf16.gmra.mxu0 %v252
    %v641 = vpop.f32.mrf.mxu0
    %v642 = vadd.f32 %v409, %v641
    %v643 = vpop.f32.mrf.mxu0
    %v644 = vadd.f32 %v411, %v643
    %v645 = vpop.f32.mrf.mxu0
    %v646 = vadd.f32 %v413, %v645
    %v647 = vpop.f32.mrf.mxu0
    %v648 = vadd.f32 %v415, %v647
    %649 = vdwg.mxu0
    %v651 = vlaneseq
    %v652 = vshrl.u32 %v651, 7
    %v653 = vsub.s32 0, %v652
    %v654 = vrot.slane %v61, %v653
    %v655 = vlaneseq
    %v656 = vshrl.u32 %v655, 7
    %v657 = vsub.s32 1, %v656
    %v658 = vrot.slane %v61, %v657
    %v661 = vadd.f32 %v612, %v654
    %v662 = vadd.f32 %v614, %v658
    %v663 = vadd.f32 %v616, %v654
    %v664 = vadd.f32 %v618, %v658
    %v665 = vadd.f32 %v622, %v654
    %v666 = vadd.f32 %v624, %v658
    %v667 = vadd.f32 %v626, %v654
    %v668 = vadd.f32 %v628, %v658
    %v669 = vadd.f32 %v632, %v654
    %v670 = vadd.f32 %v634, %v658
    %v671 = vadd.f32 %v636, %v654
    %v672 = vadd.f32 %v638, %v658
    %v673 = vadd.f32 %v642, %v654
    %v674 = vadd.f32 %v644, %v658
    %v675 = vadd.f32 %v646, %v654
    %v676 = vadd.f32 %v648, %v658
    %v677 = vmul.f32 %v661, 0.01
    %v678 = vmul.f32 %v662, 0.01
    %v679 = vmul.f32 %v663, 0.01
    %v680 = vmul.f32 %v664, 0.01
    %v681 = vmul.f32 %v665, 0.01
    %v682 = vmul.f32 %v666, 0.01
    %v683 = vmul.f32 %v667, 0.01
    %v684 = vmul.f32 %v668, 0.01
    %v685 = vmul.f32 %v669, 0.01
    %v686 = vmul.f32 %v670, 0.01
    %v687 = vmul.f32 %v671, 0.01
    %v688 = vmul.f32 %v672, 0.01
    %v689 = vmul.f32 %v673, 0.01
    %v690 = vmul.f32 %v674, 0.01
    %v691 = vmul.f32 %v675, 0.01
    %v692 = vmul.f32 %v676, 0.01
    %v693 = vmax.f32 %v661, %v677
    %v694 = vmax.f32 %v662, %v678
    %v695 = vmax.f32 %v663, %v679
    %v696 = vmax.f32 %v664, %v680
    %v697 = vmax.f32 %v665, %v681
    %v698 = vmax.f32 %v666, %v682
    %v699 = vmax.f32 %v667, %v683
    %v700 = vmax.f32 %v668, %v684
    %v701 = vmax.f32 %v669, %v685
    %v702 = vmax.f32 %v670, %v686
    %v703 = vmax.f32 %v671, %v687
    %v704 = vmax.f32 %v672, %v688
    %v705 = vmax.f32 %v673, %v689
    %v706 = vmax.f32 %v674, %v690
    %v707 = vmax.f32 %v675, %v691
    %v708 = vmax.f32 %v676, %v692
    %v709 = vpack.c.bf16 %v695, %v693
    %v710 = vpack.c.bf16 %v696, %v694
    %v711 = vpack.c.bf16 %v699, %v697
    %v712 = vpack.c.bf16 %v700, %v698
    %v713 = vpack.c.bf16 %v703, %v701
    %v714 = vpack.c.bf16 %v704, %v702
    %v715 = vpack.c.bf16 %v707, %v705
    %v716 = vpack.c.bf16 %v708, %v706
    %v717 = vld [vmem:[#allocation5] sm:$0xf]
    %v718 = vld [vmem:[#allocation5 + $0x4] sm:$0xf]
    %v719 = vld [vmem:[#allocation5 + $0x8] sm:$0xf]
    %v720 = vld [vmem:[#allocation5 + $0xc] sm:$0xf]
    %v721 = vld [vmem:[#allocation5 + $0x10] sm:$0xf]
    %v722 = vld [vmem:[#allocation5 + $0x14] sm:$0xf]
    %v723 = vld [vmem:[#allocation5 + $0x18] sm:$0xf]
    %v724 = vld [vmem:[#allocation5 + $0x1c] sm:$0xf]
    %v725 = vld [vmem:[#allocation5 + $0x20] sm:$0xf]
    %v726 = vld [vmem:[#allocation5 + $0x24] sm:$0xf]
    %v727 = vld [vmem:[#allocation5 + $0x28] sm:$0xf]
    %v728 = vld [vmem:[#allocation5 + $0x2c] sm:$0xf]
    %v729 = vld [vmem:[#allocation5 + $0x30] sm:$0xf]
    %v730 = vld [vmem:[#allocation5 + $0x34] sm:$0xf]
    %v731 = vld [vmem:[#allocation5 + $0x38] sm:$0xf]
    %v732 = vld [vmem:[#allocation5 + $0x3c] sm:$0xf]
    %v733 = vld [vmem:[#allocation5 + $0x40] sm:$0xf]
    %v734 = vld [vmem:[#allocation5 + $0x44] sm:$0xf]
    %v735 = vld [vmem:[#allocation5 + $0x48] sm:$0xf]
    %v736 = vld [vmem:[#allocation5 + $0x4c] sm:$0xf]
    %v737 = vld [vmem:[#allocation5 + $0x50] sm:$0xf]
    %v738 = vld [vmem:[#allocation5 + $0x54] sm:$0xf]
    %v739 = vld [vmem:[#allocation5 + $0x58] sm:$0xf]
    %v740 = vld [vmem:[#allocation5 + $0x5c] sm:$0xf]
    %v741 = vld [vmem:[#allocation5 + $0x60] sm:$0xf]
    %v742 = vld [vmem:[#allocation5 + $0x64] sm:$0xf]
    %v743 = vld [vmem:[#allocation5 + $0x68] sm:$0xf]
    %v744 = vld [vmem:[#allocation5 + $0x6c] sm:$0xf]
    %v745 = vld [vmem:[#allocation5 + $0x70] sm:$0xf]
    %v746 = vld [vmem:[#allocation5 + $0x74] sm:$0xf]
    %v747 = vld [vmem:[#allocation5 + $0x78] sm:$0xf]
    %v748 = vld [vmem:[#allocation5 + $0x7c] sm:$0xf]
    %v749 = vlaneseq
    %v750 = vshrl.u32 %v749, 7
    %v751 = vsub.s32 0, %v750
    %v752 = vrot.slane %v62, %v751
    %v785 = vunpack.c.l.b16 %v717
    %v786 = vunpack.c.l.b16 %v718
    %v787 = vunpack.c.l.b16 %v719
    %v788 = vunpack.c.l.b16 %v720
    %v789 = vunpack.c.l.b16 %v721
    %v790 = vunpack.c.l.b16 %v722
    %v791 = vunpack.c.l.b16 %v723
    %v792 = vunpack.c.l.b16 %v724
    %v793 = vunpack.c.l.b16 %v725
    %v794 = vunpack.c.l.b16 %v726
    %v795 = vunpack.c.l.b16 %v727
    %v796 = vunpack.c.l.b16 %v728
    %v797 = vunpack.c.l.b16 %v729
    %v798 = vunpack.c.l.b16 %v730
    %v799 = vunpack.c.l.b16 %v731
    %v800 = vunpack.c.l.b16 %v732
    %v801 = vunpack.c.l.b16 %v733
    %v802 = vunpack.c.l.b16 %v734
    %v803 = vunpack.c.l.b16 %v735
    %v804 = vunpack.c.l.b16 %v736
    %v805 = vunpack.c.l.b16 %v737
    %v806 = vunpack.c.l.b16 %v738
    %v807 = vunpack.c.l.b16 %v739
    %v808 = vunpack.c.l.b16 %v740
    %v809 = vunpack.c.l.b16 %v741
    %v810 = vunpack.c.l.b16 %v742
    %v811 = vunpack.c.l.b16 %v743
    %v812 = vunpack.c.l.b16 %v744
    %v813 = vunpack.c.l.b16 %v745
    %v814 = vunpack.c.l.b16 %v746
    %v815 = vunpack.c.l.b16 %v747
    %v816 = vunpack.c.l.b16 %v748
    %v817 = vpack.c.b16 %v786, %v785
    %v818 = vpack.c.b16 %v788, %v787
    %v819 = vpack.c.b16 %v790, %v789
    %v820 = vpack.c.b16 %v792, %v791
    %v821 = vpack.c.b16 %v794, %v793
    %v822 = vpack.c.b16 %v796, %v795
    %v823 = vpack.c.b16 %v798, %v797
    %v824 = vpack.c.b16 %v800, %v799
    %v825 = vpack.c.b16 %v802, %v801
    %v826 = vpack.c.b16 %v804, %v803
    %v827 = vpack.c.b16 %v806, %v805
    %v828 = vpack.c.b16 %v808, %v807
    %v829 = vpack.c.b16 %v810, %v809
    %v830 = vpack.c.b16 %v812, %v811
    %v831 = vpack.c.b16 %v814, %v813
    %v832 = vpack.c.b16 %v816, %v815
    %849 = vmatprep.subr.bf16.mxu0 0
    %850 = vmatpush1.bf16.msra.mxu0 %v824
    %851 = vmatprep.subr.bf16.mxu0 0
    %852 = vmatpush1.bf16.msra.mxu0 %v823
    %853 = vmatprep.subr.bf16.mxu0 0
    %854 = vmatpush1.bf16.msra.mxu0 %v822
    %855 = vmatprep.subr.bf16.mxu0 0
    %856 = vmatpush1.bf16.msra.mxu0 %v821
    %857 = vmatprep.subr.bf16.mxu0 0
    %858 = vmatpush1.bf16.msra.mxu0 %v820
    %859 = vmatprep.subr.bf16.mxu0 0
    %860 = vmatpush1.bf16.msra.mxu0 %v819
    %861 = vmatprep.subr.bf16.mxu0 0
    %862 = vmatpush1.bf16.msra.mxu0 %v818
    %863 = vmatprep.subr.bf16.mxu0 0
    %864 = vmatpush1.bf16.msra.mxu0 %v817
    %865 = vmatprep.subr.bf16.mxu0 0
    %866 = vmatpush2.bf16.msra.mxu0 %v832
    %867 = vmatprep.subr.bf16.mxu0 0
    %868 = vmatpush2.bf16.msra.mxu0 %v831
    %869 = vmatprep.subr.bf16.mxu0 0
    %870 = vmatpush2.bf16.msra.mxu0 %v830
    %871 = vmatprep.subr.bf16.mxu0 0
    %872 = vmatpush2.bf16.msra.mxu0 %v829
    %873 = vmatprep.subr.bf16.mxu0 0
    %874 = vmatpush2.bf16.msra.mxu0 %v828
    %875 = vmatprep.subr.bf16.mxu0 0
    %876 = vmatpush2.bf16.msra.mxu0 %v827
    %877 = vmatprep.subr.bf16.mxu0 0
    %878 = vmatpush2.bf16.msra.mxu0 %v826
    %879 = vmatprep.subr.bf16.mxu0 0
    %880 = vmatpush2.bf16.msra.mxu0 %v825
    %881 = vmatprep.mubr.bf16.mxu0 %v710
    %882 = vmatmul.mubr.bf16.gmra.mxu0 %v709
    %v883 = vpop.f32.mrf.mxu0
    %v884 = vadd.f32 %v752, %v883
    %v885 = vpop.f32.mrf.mxu0
    %v886 = vpop.f32.mrf.mxu0
    %v887 = vadd.f32 %v752, %v886
    %v888 = vpop.f32.mrf.mxu0
    %889 = vmatprep.mubr.bf16.mxu0 %v712
    %890 = vmatmul.mubr.bf16.gmra.mxu0 %v711
    %v891 = vpop.f32.mrf.mxu0
    %v892 = vadd.f32 %v752, %v891
    %v893 = vpop.f32.mrf.mxu0
    %v894 = vpop.f32.mrf.mxu0
    %v895 = vadd.f32 %v752, %v894
    %v896 = vpop.f32.mrf.mxu0
    %897 = vmatprep.mubr.bf16.mxu0 %v714
    %898 = vmatmul.mubr.bf16.gmra.mxu0 %v713
    %v899 = vpop.f32.mrf.mxu0
    %v900 = vadd.f32 %v752, %v899
    %v901 = vpop.f32.mrf.mxu0
    %v902 = vpop.f32.mrf.mxu0
    %v903 = vadd.f32 %v752, %v902
    %v904 = vpop.f32.mrf.mxu0
    %905 = vmatprep.mubr.bf16.mxu0 %v716
    %906 = vmatmul.mubr.bf16.gmra.mxu0 %v715
    %v907 = vpop.f32.mrf.mxu0
    %v908 = vadd.f32 %v752, %v907
    %v909 = vpop.f32.mrf.mxu0
    %v910 = vpop.f32.mrf.mxu0
    %v911 = vadd.f32 %v752, %v910
    %v912 = vpop.f32.mrf.mxu0
    %913 = vdwg.mxu0
    %v914 = vmul.f32 %v884, 0.01
    %v915 = vmul.f32 %v887, 0.01
    %v916 = vmul.f32 %v892, 0.01
    %v917 = vmul.f32 %v895, 0.01
    %v918 = vmul.f32 %v900, 0.01
    %v919 = vmul.f32 %v903, 0.01
    %v920 = vmul.f32 %v908, 0.01
    %v921 = vmul.f32 %v911, 0.01
    %v922 = vmax.f32 %v884, %v914
    %v923 = vmax.f32 %v887, %v915
    %v924 = vmax.f32 %v892, %v916
    %v925 = vmax.f32 %v895, %v917
    %v926 = vmax.f32 %v900, %v918
    %v927 = vmax.f32 %v903, %v919
    %v928 = vmax.f32 %v908, %v920
    %v929 = vmax.f32 %v911, %v921
    %v930 = vld [vmem:[%s6] sm:$0x1]
    %v931 = vpack.c.bf16 %v923, %v922
    %v932 = vpack.c.bf16 %v925, %v924
    %v933 = vpack.c.bf16 %v927, %v926
    %v934 = vpack.c.bf16 %v929, %v928
    %936 = vset.pattern.permute.xlu0 0
    %937 = vperm.xlu0 %936, %v63
    %v938 = vpop.permute.xlu0 %937
    %v941 = vunpack.c.l.s4 839922192
    %v942 = vunpack.c.0.s8 %v941
    %v943 = vlaneseq
    %v944 = vshrl.u32 %v943, 7
    %v945 = vsub.s32 %v942, %v944
    %v946 = vrot.slane %v938, %v945
    %947 = vmatprep.subr.bf16.mxu0 0
    %948 = vmatpush1.bf16.xpose.msra.mxu0 0
    %949 = vmatprep.subr.bf16.mxu0 0
    %950 = vmatpush1.bf16.xpose.msra.mxu0 0
    %951 = vmatprep.subr.bf16.mxu0 0
    %952 = vmatpush1.bf16.xpose.msra.mxu0 0
    %953 = vmatprep.subr.bf16.mxu0 0
    %954 = vmatpush1.bf16.xpose.msra.mxu0 0
    %955 = vmatprep.subr.bf16.mxu0 0
    %956 = vmatpush1.bf16.xpose.msra.mxu0 %v934
    %957 = vmatprep.subr.bf16.mxu0 0
    %958 = vmatpush1.bf16.xpose.msra.mxu0 %v933
    %959 = vmatprep.subr.bf16.mxu0 0
    %960 = vmatpush1.bf16.xpose.msra.mxu0 %v932
    %961 = vmatprep.subr.bf16.mxu0 0
    %962 = vmatpush1.bf16.xpose.msra.mxu0 %v931
    %963 = vmatprep.subr.bf16.mxu0 0
    %964 = vmatpush2.bf16.xpose.msra.mxu0 0
    %965 = vmatprep.subr.bf16.mxu0 0
    %966 = vmatpush2.bf16.xpose.msra.mxu0 0
    %967 = vmatprep.subr.bf16.mxu0 0
    %968 = vmatpush2.bf16.xpose.msra.mxu0 0
    %969 = vmatprep.subr.bf16.mxu0 0
    %970 = vmatpush2.bf16.xpose.msra.mxu0 0
    %971 = vmatprep.subr.bf16.mxu0 0
    %972 = vmatpush2.bf16.xpose.msra.mxu0 0
    %973 = vmatprep.subr.bf16.mxu0 0
    %974 = vmatpush2.bf16.xpose.msra.mxu0 0
    %975 = vmatprep.subr.bf16.mxu0 0
    %976 = vmatpush2.bf16.xpose.msra.mxu0 0
    %977 = vmatprep.subr.bf16.mxu0 0
    %978 = vmatpush2.bf16.xpose.msra.mxu0 0
    %979 = vmatprep.mubr.bf16.mxu0 0
    %980 = vmatmul.mubr.bf16.gmra.mxu0 %v930
    %v981 = vpop.f32.mrf.mxu0
    %v982 = vadd.f32 %v946, %v981
    %v983 = vpop.f32.mrf.mxu0
    %v984 = vpop.f32.mrf.mxu0
    %v985 = vpop.f32.mrf.mxu0
    %986 = vdwg.mxu0
    %vm987 = vcmask 516096
    %988 = vst.msk [vmem:[#allocation7] sm:$0x1] %vm987, %v982
    // Predicated region
    $region42: #{tpu_custom_call.1} parent=1 // pred_check
      _
    $region43: #{tpu_custom_call.1} parent=1 // pred_check_branch
      %990 = sbr.rel (0) target = $region45
    $region44: #{tpu_custom_call.1} parent=1 // pred_region
      %s992 = ssub.s32 16, 16
      %993 = vsyncadd [#allocation4], %s992
      %s995 = sshll.u32 [#allocation7], 4
      %s996 = int_to_ptr.vmem [resolvable:$true] %s995
      %998 = dma.vmem_to_hbm [thread:$0]  %s996, 16, %s8, [#allocation4]
    $region45: #{tpu_custom_call.1} parent=1 // pred_fallthru
      _
    // Predicated region
    $region46: #{tpu_custom_call.1} parent=1 // pred_check
      _
    $region47: #{tpu_custom_call.1} parent=1 // pred_check_branch
      %1000 = sbr.rel (0) target = $region49
    $region48: #{tpu_custom_call.1} parent=1 // pred_region
      %1001 = dma.done [#allocation4], 16
    $region49: #{tpu_custom_call.1} parent=1 // pred_fallthru
      _
    %1002 = vsyncpa [#allocation3], 1
    %1003 = vsyncpa [#allocation6], 1
    %1004 = vsyncpa [#allocation4], 1

</llo_original>
